<compile_context>
chip_gen: v6e
topology: v6e:2x2x1
jax: 0.10.0
libtpu: 0.0.40
codegen_flags: <defaults>
</compile_context>

<pallas_src>
import functools

import jax
import jax.numpy as jnp
from jax.experimental import pallas as pl
from jax.experimental.pallas import tpu as pltpu

EPS = 1e-5


def mlp_bn_kernel(n_ref,     # SMEM [1] int32: number of valid batch columns
                  x_ref,     # VMEM [2, Bp]  feature-major input (lane = batch)
                  p_ref,     # VMEM [64, 8]  packed small params (see wrapper)
                  w2_ref,    # VMEM [32, 64] fc2.weight (out, in)
                  o_ref,     # VMEM [1, Bp]  lane-dense output
                  *, maybe_padded):
    x = x_ref[...]                                     # [2, Bp]
    Bp = x.shape[1]
    n = n_ref[0]
    inv_n = 1.0 / n.astype(jnp.float32)                # scalar slot, ~free

    p = p_ref[...]                                     # [64, 8] packed slab
    w1a, w1b = p[:, 0:1], p[:, 1:2]                    # fc1 weight columns [64,1]
    g1, beta1 = p[:, 2:3], p[:, 3:4]                   # bn1 affine          [64,1]
    g2, beta2 = p[0:32, 4:5], p[0:32, 5:6]             # bn2 affine          [32,1]
    w3_col = p[0:32, 6:7]                              # fc3 weight (col)    [32,1]
    b3 = p[0:1, 7:8]                                   # fc3 bias            [1,1]

    # --- fc1: K=2 contraction on the VPU (two broadcast FMAs, no bias:
    #          the bias is absorbed exactly by training-mode BatchNorm) -----
    h1 = w1a * x[0:1, :] + w1b * x[1:2, :]             # [64, Bp]; padded cols == 0

    # --- BN1 + ReLU: padded columns are exactly zero, so unmasked sums over
    #     all Bp lanes divided by n give the exact valid-batch statistics ----
    mu1 = jnp.sum(h1, axis=1, keepdims=True) * inv_n               # [64, 1]
    e2_1 = jnp.sum(h1 * h1, axis=1, keepdims=True) * inv_n         # [64, 1]
    var1 = jnp.maximum(e2_1 - mu1 * mu1, 0.0)
    s1 = g1 * jax.lax.rsqrt(var1 + EPS)
    t1 = beta1 - mu1 * s1
    h1 = jnp.maximum(h1 * s1 + t1, 0.0)                # folded BN affine + ReLU

    # --- fc2: [32,64] @ [64,Bp] on the MXU (no bias, BN absorbs it) --------
    h2 = jnp.dot(w2_ref[...], h1, preferred_element_type=jnp.float32)  # [32, Bp]

    # --- BN2 + ReLU: padded columns of h2 are nonzero (ReLU(shift1) != 0),
    #     so mask them out of the statistics -- only when padding exists ----
    if maybe_padded:
        lane = jax.lax.broadcasted_iota(jnp.int32, (1, Bp), 1)
        mask = (lane < n).astype(jnp.float32)           # [1, Bp]
        h2m = h2 * mask
    else:
        h2m = h2
    mu2 = jnp.sum(h2m, axis=1, keepdims=True) * inv_n              # [32, 1]
    e2_2 = jnp.sum(h2m * h2, axis=1, keepdims=True) * inv_n        # [32, 1]
    var2 = jnp.maximum(e2_2 - mu2 * mu2, 0.0)
    s2 = g2 * jax.lax.rsqrt(var2 + EPS)
    t2 = beta2 - mu2 * s2
    h2 = jnp.maximum(h2 * s2 + t2, 0.0)

    # --- fc3: [1,32] @ [32,Bp] on the (otherwise idle) MXU ------------------
    o = jnp.dot(w3_col.T, h2, preferred_element_type=jnp.float32) + b3  # [1, Bp]
    o_ref[...] = o.astype(o_ref.dtype)


def mlp_forward(x, params):
    """x: [B, 2] float32 -> [B, 1] float32. params in PyTorch layout."""
    (w1, b1, g1, beta1, w2, b2, g2, beta2, w3, b3) = params
    del b1, b2  # exactly cancelled by training-mode BatchNorm (mu absorbs them)

    B = x.shape[0]
    Bp = ((B + 127) // 128) * 128                  # pad batch to 128-lane multiple
    maybe_padded = (Bp != B)

    # TODO(synk): for a feature-major upstream data pipeline this transpose+pad
    # HBM round-trip disappears; the [2, Bp] slab is small so kept here.
    x_t = jnp.pad(x.astype(jnp.float32).T, ((0, 0), (0, Bp - B)))       # [2, Bp]

    # Pack all small parameters into a single [64, 8] slab (one DMA, one
    # lane-padded VMEM buffer instead of eleven).
    def col(v, n):
        v = v.reshape(-1).astype(jnp.float32)
        return jnp.pad(v, (0, 64 - n)).reshape(64, 1)

    slab = jnp.concatenate(
        [col(w1[:, 0], 64), col(w1[:, 1], 64), col(g1, 64), col(beta1, 64),
         col(g2, 32), col(beta2, 32), col(w3.reshape(-1), 32), col(b3, 1)],
        axis=1)                                                          # [64, 8]

    n_arr = jnp.array([B], dtype=jnp.int32)

    vmem = pl.BlockSpec(memory_space=pltpu.MemorySpace.VMEM)
    smem = pl.BlockSpec(memory_space=pltpu.MemorySpace.SMEM)

    out = pl.pallas_call(
        functools.partial(mlp_bn_kernel, maybe_padded=maybe_padded),
        out_shape=jax.ShapeDtypeStruct((1, Bp), jnp.float32),
        in_specs=[smem, vmem, vmem, vmem],
        out_specs=vmem,
        compiler_params=pltpu.CompilerParams(vmem_limit_bytes=48 * 1024 * 1024),
    )(n_arr, x_t, slab, w2.astype(jnp.float32))

    return out[:, :B].T                                                 # [B, 1]


def make_params(key):
    """PyTorch-layout params: Linear weight [out, in], bias [out]; BN weight/bias [F]."""
    k1, k2, k3, k4, k5, k6 = jax.random.split(key, 6)

    def linear(kw, kb, fan_in, fan_out):
        bound = 1.0 / jnp.sqrt(fan_in)
        w = jax.random.uniform(kw, (fan_out, fan_in), jnp.float32, -bound, bound)
        b = jax.random.uniform(kb, (fan_out,), jnp.float32, -bound, bound)
        return w, b

    w1, b1 = linear(k1, k2, 2, 64)
    w2, b2 = linear(k3, k4, 64, 32)
    w3, b3 = linear(k5, k6, 32, 1)

    g1 = jnp.ones((64,), jnp.float32)
    beta1 = jnp.zeros((64,), jnp.float32)
    g2 = jnp.ones((32,), jnp.float32)
    beta2 = jnp.zeros((32,), jnp.float32)

    return (w1, b1, g1, beta1, w2, b2, g2, beta2, w3, b3)


def reference_forward(x, params):
    """Plain-JAX reference (training-mode BatchNorm), batch-major like PyTorch."""
    (w1, b1, g1, beta1, w2, b2, g2, beta2, w3, b3) = params

    def bn(h, g, beta):
        mu = jnp.mean(h, axis=0, keepdims=True)
        var = jnp.mean((h - mu) ** 2, axis=0, keepdims=True)
        return (h - mu) / jnp.sqrt(var + EPS) * g + beta

    h = jax.nn.relu(bn(x @ w1.T + b1, g1, beta1))
    h = jax.nn.relu(bn(h @ w2.T + b2, g2, beta2))
    return h @ w3.T + b3


if __name__ == "__main__":
    key = jax.random.PRNGKey(0)
    kx, kx2, kp = jax.random.split(key, 3)
    params = make_params(kp)

    # Small batch (exercises the padded/masked BN2 path).
    B = 8
    x = jax.random.normal(kx, (B, 2), jnp.float32)
    out = mlp_forward(x, params)
    jax.block_until_ready(out)
    ref = reference_forward(x, params)
    assert out.shape == (B, 1)
    assert jnp.allclose(out, ref, atol=1e-4, rtol=1e-4)

    # 128-aligned batch (exercises the mask-free fast path).
    B2 = 128
    x2 = jax.random.normal(kx2, (B2, 2), jnp.float32)
    out2 = mlp_forward(x2, params)
    jax.block_until_ready(out2)
    ref2 = reference_forward(x2, params)
    assert out2.shape == (B2, 1)
    assert jnp.allclose(out2, ref2, atol=1e-4, rtol=1e-4)

    print("KERNEL_OK")
</pallas_src>

<mosaic_0001>
module attributes {stable_mosaic.version = 11 : i64} {
  func.func @mlp_bn_kernel(%arg0: memref<1xi32, #tpu.memory_space<smem>>, %arg1: memref<2x128xf32, #tpu.memory_space<vmem>>, %arg2: memref<64x8xf32, #tpu.memory_space<vmem>>, %arg3: memref<32x64xf32, #tpu.memory_space<vmem>>, %arg4: memref<1x128xf32, #tpu.memory_space<vmem>>) attributes {dimension_semantics = [], scalar_prefetch = 0 : i64, scratch_operands = 0 : i64, tpu.core_type = #tpu.core_type<tc>} {
    %c0 = arith.constant 0 : index
    %c0_0 = arith.constant 0 : index
    %0 = vector.load %arg1[%c0, %c0_0] : memref<2x128xf32, #tpu.memory_space<vmem>>, vector<2x128xf32>
    %c0_1 = arith.constant 0 : index
    %1 = memref.load %arg0[%c0_1] : memref<1xi32, #tpu.memory_space<smem>>
    %2 = arith.sitofp %1 : i32 to f32
    %cst = arith.constant 1.000000e+00 : f32
    %3 = arith.divf %cst, %2 : f32
    %c0_2 = arith.constant 0 : index
    %c0_3 = arith.constant 0 : index
    %4 = vector.load %arg2[%c0_2, %c0_3] : memref<64x8xf32, #tpu.memory_space<vmem>>, vector<64x8xf32>
    %5 = vector.extract_strided_slice %4 {offsets = [0, 0], sizes = [64, 1], strides = [1, 1]} : vector<64x8xf32> to vector<64x1xf32>
    %6 = vector.extract_strided_slice %4 {offsets = [0, 1], sizes = [64, 1], strides = [1, 1]} : vector<64x8xf32> to vector<64x1xf32>
    %7 = vector.extract_strided_slice %4 {offsets = [0, 2], sizes = [64, 1], strides = [1, 1]} : vector<64x8xf32> to vector<64x1xf32>
    %8 = vector.extract_strided_slice %4 {offsets = [0, 3], sizes = [64, 1], strides = [1, 1]} : vector<64x8xf32> to vector<64x1xf32>
    %9 = vector.extract_strided_slice %4 {offsets = [0, 4], sizes = [32, 1], strides = [1, 1]} : vector<64x8xf32> to vector<32x1xf32>
    %10 = vector.extract_strided_slice %4 {offsets = [0, 5], sizes = [32, 1], strides = [1, 1]} : vector<64x8xf32> to vector<32x1xf32>
    %11 = vector.extract_strided_slice %4 {offsets = [0, 6], sizes = [32, 1], strides = [1, 1]} : vector<64x8xf32> to vector<32x1xf32>
    %12 = vector.extract_strided_slice %4 {offsets = [0, 7], sizes = [1, 1], strides = [1, 1]} : vector<64x8xf32> to vector<1x1xf32>
    %13 = vector.extract_strided_slice %0 {offsets = [0, 0], sizes = [1, 128], strides = [1, 1]} : vector<2x128xf32> to vector<1x128xf32>
    %14 = vector.broadcast %5 : vector<64x1xf32> to vector<64x128xf32>
    %15 = vector.broadcast %13 : vector<1x128xf32> to vector<64x128xf32>
    %16 = arith.mulf %14, %15 : vector<64x128xf32>
    %17 = vector.extract_strided_slice %0 {offsets = [1, 0], sizes = [1, 128], strides = [1, 1]} : vector<2x128xf32> to vector<1x128xf32>
    %18 = vector.broadcast %6 : vector<64x1xf32> to vector<64x128xf32>
    %19 = vector.broadcast %17 : vector<1x128xf32> to vector<64x128xf32>
    %20 = arith.mulf %18, %19 : vector<64x128xf32>
    %21 = arith.addf %16, %20 : vector<64x128xf32>
    %cst_4 = arith.constant dense<0.000000e+00> : vector<64xf32>
    %22 = vector.multi_reduction <add>, %21, %cst_4 [1] : vector<64x128xf32> to vector<64xf32>
    %23 = vector.shape_cast %22 : vector<64xf32> to vector<64x1xf32>
    %24 = vector.broadcast %3 : f32 to vector<64x1xf32>
    %25 = arith.mulf %23, %24 : vector<64x1xf32>
    %26 = arith.mulf %21, %21 : vector<64x128xf32>
    %cst_5 = arith.constant dense<0.000000e+00> : vector<64xf32>
    %27 = vector.multi_reduction <add>, %26, %cst_5 [1] : vector<64x128xf32> to vector<64xf32>
    %28 = vector.shape_cast %27 : vector<64xf32> to vector<64x1xf32>
    %29 = vector.broadcast %3 : f32 to vector<64x1xf32>
    %30 = arith.mulf %28, %29 : vector<64x1xf32>
    %31 = arith.mulf %25, %25 : vector<64x1xf32>
    %32 = arith.subf %30, %31 : vector<64x1xf32>
    %cst_6 = arith.constant 0.000000e+00 : f32
    %33 = vector.broadcast %cst_6 : f32 to vector<64x1xf32>
    %34 = arith.maximumf %32, %33 : vector<64x1xf32>
    %cst_7 = arith.constant 9.99999974E-6 : f32
    %35 = vector.broadcast %cst_7 : f32 to vector<64x1xf32>
    %36 = arith.addf %34, %35 : vector<64x1xf32>
    %37 = math.rsqrt %36 : vector<64x1xf32>
    %38 = arith.mulf %7, %37 : vector<64x1xf32>
    %39 = arith.mulf %25, %38 : vector<64x1xf32>
    %40 = arith.subf %8, %39 : vector<64x1xf32>
    %41 = vector.broadcast %38 : vector<64x1xf32> to vector<64x128xf32>
    %42 = arith.mulf %21, %41 : vector<64x128xf32>
    %43 = vector.broadcast %40 : vector<64x1xf32> to vector<64x128xf32>
    %44 = arith.addf %42, %43 : vector<64x128xf32>
    %cst_8 = arith.constant 0.000000e+00 : f32
    %45 = vector.broadcast %cst_8 : f32 to vector<64x128xf32>
    %46 = arith.maximumf %44, %45 : vector<64x128xf32>
    %c0_9 = arith.constant 0 : index
    %c0_10 = arith.constant 0 : index
    %47 = vector.load %arg3[%c0_9, %c0_10] : memref<32x64xf32, #tpu.memory_space<vmem>>, vector<32x64xf32>
    %cst_11 = arith.constant dense<0.000000e+00> : vector<32x128xf32>
    %48 = tpu.matmul %47, %46, %cst_11 {dimension_numbers = #tpu.dot_dimension_numbers<[1], [0], [0], [1], [0, 0, 1, 1], [], []>} : vector<32x64xf32>, vector<64x128xf32>, vector<32x128xf32> -> vector<32x128xf32>
    %49 = tpu.iota {dimensions = array<i32: 1>} : vector<1x128xi32>
    %50 = vector.broadcast %1 : i32 to vector<1x128xi32>
    %51 = arith.cmpi slt, %49, %50 : vector<1x128xi32>
    %52 = arith.extui %51 : vector<1x128xi1> to vector<1x128xi32>
    %53 = arith.sitofp %52 : vector<1x128xi32> to vector<1x128xf32>
    %54 = vector.broadcast %53 : vector<1x128xf32> to vector<32x128xf32>
    %55 = arith.mulf %48, %54 : vector<32x128xf32>
    %cst_12 = arith.constant dense<0.000000e+00> : vector<32xf32>
    %56 = vector.multi_reduction <add>, %55, %cst_12 [1] : vector<32x128xf32> to vector<32xf32>
    %57 = vector.shape_cast %56 : vector<32xf32> to vector<32x1xf32>
    %58 = vector.broadcast %3 : f32 to vector<32x1xf32>
    %59 = arith.mulf %57, %58 : vector<32x1xf32>
    %60 = arith.mulf %55, %48 : vector<32x128xf32>
    %cst_13 = arith.constant dense<0.000000e+00> : vector<32xf32>
    %61 = vector.multi_reduction <add>, %60, %cst_13 [1] : vector<32x128xf32> to vector<32xf32>
    %62 = vector.shape_cast %61 : vector<32xf32> to vector<32x1xf32>
    %63 = vector.broadcast %3 : f32 to vector<32x1xf32>
    %64 = arith.mulf %62, %63 : vector<32x1xf32>
    %65 = arith.mulf %59, %59 : vector<32x1xf32>
    %66 = arith.subf %64, %65 : vector<32x1xf32>
    %cst_14 = arith.constant 0.000000e+00 : f32
    %67 = vector.broadcast %cst_14 : f32 to vector<32x1xf32>
    %68 = arith.maximumf %66, %67 : vector<32x1xf32>
    %cst_15 = arith.constant 9.99999974E-6 : f32
    %69 = vector.broadcast %cst_15 : f32 to vector<32x1xf32>
    %70 = arith.addf %68, %69 : vector<32x1xf32>
    %71 = math.rsqrt %70 : vector<32x1xf32>
    %72 = arith.mulf %9, %71 : vector<32x1xf32>
    %73 = arith.mulf %59, %72 : vector<32x1xf32>
    %74 = arith.subf %10, %73 : vector<32x1xf32>
    %75 = vector.broadcast %72 : vector<32x1xf32> to vector<32x128xf32>
    %76 = arith.mulf %48, %75 : vector<32x128xf32>
    %77 = vector.broadcast %74 : vector<32x1xf32> to vector<32x128xf32>
    %78 = arith.addf %76, %77 : vector<32x128xf32>
    %cst_16 = arith.constant 0.000000e+00 : f32
    %79 = vector.broadcast %cst_16 : f32 to vector<32x128xf32>
    %80 = arith.maximumf %78, %79 : vector<32x128xf32>
    %81 = tpu.transpose %11, [1, 0] : vector<32x1xf32> -> vector<1x32xf32>
    %cst_17 = arith.constant dense<0.000000e+00> : vector<1x128xf32>
    %82 = tpu.matmul %81, %80, %cst_17 {dimension_numbers = #tpu.dot_dimension_numbers<[1], [0], [0], [1], [0, 0, 1, 1], [], []>} : vector<1x32xf32>, vector<32x128xf32>, vector<1x128xf32> -> vector<1x128xf32>
    %83 = vector.broadcast %12 : vector<1x1xf32> to vector<1x128xf32>
    %84 = arith.addf %82, %83 : vector<1x128xf32>
    %c0_18 = arith.constant 0 : index
    %c0_19 = arith.constant 0 : index
    %85 = vector.load %arg4[%c0_18, %c0_19] : memref<1x128xf32, #tpu.memory_space<vmem>>, vector<1x128xf32>
    tpu.vector_store %arg4[%c0_18, %c0_19], %84 {strides = array<i32>} : memref<1x128xf32, #tpu.memory_space<vmem>>, vector<1x128xf32>,
    return
  }
}

</mosaic_0001>

<llo_original>
// kernel: tpu_custom_call.1
$region0: #{tpu_custom_call.1}
  #allocation0 [shape = 'u32[]', space=smem, size = 0x4, offset = 0x4, fixed_abs, tag = 'smem constant byte address 0x4 - core index']
  #allocation1 [shape = 'u32[144,128]{1,0:T(1,128)}', space=vmem, size = 0x12000, scoped, tag = 'internal scratch']
  #allocation2 [shape = 's32[1]{0:T(128)S(6)}', space=smem, size = 0x200, scoped, tag = 'scoped memory for tpu_custom_call.1']
  %s0 = inlined_call_operand.<no memory space> [shape: s32[1], index: 0, kind: input, shape index: {}]
  %s1 = inlined_call_operand.vmem [shape: f32[2,128], index: 1, kind: input, shape index: {}]
  %s2 = inlined_call_operand.vmem [shape: f32[64,8], index: 2, kind: input, shape index: {}]
  %s3 = inlined_call_operand.vmem [shape: f32[32,64], index: 3, kind: input, shape index: {}]
  %s4 = inlined_call_operand.hbm [shape: f32[1,128], index: 4, kind: output, shape index: {}]
  %s5 = sld [smem:[#allocation0]]
  $region26: #{tpu_custom_call.1} parent=0
    _
  %s7 = ssub.s32 1, %s5
  %s8 = scalar_select 0, %s7, %s5
  %9 = sst [smem:[#allocation2]] %s0
  $region1: #{tpu_custom_call.1} parent=0
    #allocation3 [shape = 'u8[512]{0}', space=vmem, size = 0x400, scoped, tag = 'output window, operand 0, single buffered']
    #allocation4 [shape = 's32[1]{0}', space=sflag, size = 0x4, scoped, tag = 'scoped memory for tpu_custom_call.1']
    %10 = vsyncpa [#allocation4], 0
    // Predicated region
    $region2: #{tpu_custom_call.1} parent=1 // pred_check
      _
    $region3: #{tpu_custom_call.1} parent=1 // pred_check_branch
      %12 = sbr.rel (0) target = $region5
    $region4: #{tpu_custom_call.1} parent=1 // pred_region
      _
    $region5: #{tpu_custom_call.1} parent=1 // pred_fallthru
      _
    // Predicated region
    $region6: #{tpu_custom_call.1} parent=1 // pred_check
      _
    $region7: #{tpu_custom_call.1} parent=1 // pred_check_branch
      %14 = sbr.rel (0) target = $region9
    $region8: #{tpu_custom_call.1} parent=1 // pred_region
      _
    $region9: #{tpu_custom_call.1} parent=1 // pred_fallthru
      _
    // Predicated region
    $region10: #{tpu_custom_call.1} parent=1 // pred_check
      _
    $region11: #{tpu_custom_call.1} parent=1 // pred_check_branch
      %16 = sbr.rel (0) target = $region13
    $region12: #{tpu_custom_call.1} parent=1 // pred_region
      _
    $region13: #{tpu_custom_call.1} parent=1 // pred_fallthru
      _
    // Predicated region
    $region14: #{tpu_custom_call.1} parent=1 // pred_check
      _
    $region15: #{tpu_custom_call.1} parent=1 // pred_check_branch
      %18 = sbr.rel (0) target = $region17
    $region16: #{tpu_custom_call.1} parent=1 // pred_region
      _
    $region17: #{tpu_custom_call.1} parent=1 // pred_fallthru
      _
    %v19 = vld [vmem:[%s1] sm:$0x3]
    %s20 = sld [smem:[#allocation2]]
    %s21 = scvt.s32.f32 %s20
    %v22 = vstv %s21
    %v23 = vrcp.pop %v22
    %s24 = vtos %v23
    %v25 = vld [vmem:[%s2] sm:$0xff]
    %v26 = vld [vmem:[%s2 + $0x8] sm:$0xff]
    %v27 = vld [vmem:[%s2 + $0x10] sm:$0xff]
    %v28 = vld [vmem:[%s2 + $0x18] sm:$0xff]
    %v29 = vld [vmem:[%s2 + $0x20] sm:$0xff]
    %v30 = vld [vmem:[%s2 + $0x28] sm:$0xff]
    %v31 = vld [vmem:[%s2 + $0x30] sm:$0xff]
    %v32 = vld [vmem:[%s2 + $0x38] sm:$0xff]
    %34 = vset.pattern.permute.xlu0 0
    %35 = vperm.xlu0 %34, %v25
    %v36 = vpop.permute.xlu0 %35
    %39 = vset.pattern.permute.xlu0 0
    %40 = vperm.xlu0 %39, %v26
    %v41 = vpop.permute.xlu0 %40
    %44 = vset.pattern.permute.xlu0 0
    %45 = vperm.xlu0 %44, %v27
    %v46 = vpop.permute.xlu0 %45
    %49 = vset.pattern.permute.xlu0 0
    %50 = vperm.xlu0 %49, %v28
    %v51 = vpop.permute.xlu0 %50
    %54 = vset.pattern.permute.xlu0 0
    %55 = vperm.xlu0 %54, %v29
    %v56 = vpop.permute.xlu0 %55
    %59 = vset.pattern.permute.xlu0 0
    %60 = vperm.xlu0 %59, %v30
    %v61 = vpop.permute.xlu0 %60
    %64 = vset.pattern.permute.xlu0 0
    %65 = vperm.xlu0 %64, %v31
    %v66 = vpop.permute.xlu0 %65
    %69 = vset.pattern.permute.xlu0 0
    %70 = vperm.xlu0 %69, %v32
    %v71 = vpop.permute.xlu0 %70
    %v73 = vlaneseq
    %v74 = vshrl.u32 %v73, 7
    %v75 = vsub.s32 0, %v74
    %v76 = vrot.slane %v19, %v75
    %v77 = vmul.f32 %v36, %v76
    %v78 = vmul.f32 %v41, %v76
    %v79 = vmul.f32 %v46, %v76
    %v80 = vmul.f32 %v51, %v76
    %v81 = vmul.f32 %v56, %v76
    %v82 = vmul.f32 %v61, %v76
    %v83 = vmul.f32 %v66, %v76
    %v84 = vmul.f32 %v71, %v76
    %85 = vset.pattern.permute.xlu0 1
    %86 = vperm.xlu0 %85, %v25
    %v87 = vpop.permute.xlu0 %86
    %89 = vset.pattern.permute.xlu0 1
    %90 = vperm.xlu0 %89, %v26
    %v91 = vpop.permute.xlu0 %90
    %93 = vset.pattern.permute.xlu0 1
    %94 = vperm.xlu0 %93, %v27
    %v95 = vpop.permute.xlu0 %94
    %97 = vset.pattern.permute.xlu0 1
    %98 = vperm.xlu0 %97, %v28
    %v99 = vpop.permute.xlu0 %98
    %101 = vset.pattern.permute.xlu0 1
    %102 = vperm.xlu0 %101, %v29
    %v103 = vpop.permute.xlu0 %102
    %105 = vset.pattern.permute.xlu0 1
    %106 = vperm.xlu0 %105, %v30
    %v107 = vpop.permute.xlu0 %106
    %109 = vset.pattern.permute.xlu0 1
    %110 = vperm.xlu0 %109, %v31
    %v111 = vpop.permute.xlu0 %110
    %113 = vset.pattern.permute.xlu0 1
    %114 = vperm.xlu0 %113, %v32
    %v115 = vpop.permute.xlu0 %114
    %v117 = vlaneseq
    %v118 = vshrl.u32 %v117, 7
    %v119 = vsub.s32 1, %v118
    %v120 = vrot.slane %v19, %v119
    %v121 = vmul.f32 %v87, %v120
    %v122 = vmul.f32 %v91, %v120
    %v123 = vmul.f32 %v95, %v120
    %v124 = vmul.f32 %v99, %v120
    %v125 = vmul.f32 %v103, %v120
    %v126 = vmul.f32 %v107, %v120
    %v127 = vmul.f32 %v111, %v120
    %v128 = vmul.f32 %v115, %v120
    %v129 = vadd.f32 %v77, %v121
    %v130 = vadd.f32 %v78, %v122
    %v131 = vadd.f32 %v79, %v123
    %v132 = vadd.f32 %v80, %v124
    %v133 = vadd.f32 %v81, %v125
    %v134 = vadd.f32 %v82, %v126
    %v135 = vadd.f32 %v83, %v127
    %v136 = vadd.f32 %v84, %v128
    %137 = vadd.xlane.f32.xlu0 %v129
    %v138 = vpop.xlane.xlu0 %137
    %139 = vadd.xlane.f32.xlu0 %v130
    %v140 = vpop.xlane.xlu0 %139
    %141 = vadd.xlane.f32.xlu0 %v131
    %v142 = vpop.xlane.xlu0 %141
    %143 = vadd.xlane.f32.xlu0 %v132
    %v144 = vpop.xlane.xlu0 %143
    %145 = vadd.xlane.f32.xlu0 %v133
    %v146 = vpop.xlane.xlu0 %145
    %147 = vadd.xlane.f32.xlu0 %v134
    %v148 = vpop.xlane.xlu0 %147
    %149 = vadd.xlane.f32.xlu0 %v135
    %v150 = vpop.xlane.xlu0 %149
    %151 = vadd.xlane.f32.xlu0 %v136
    %v152 = vpop.xlane.xlu0 %151
    %v153 = vstv %s24
    %v154 = vmul.f32 %v138, %v153
    %v155 = vmul.f32 %v140, %v153
    %v156 = vmul.f32 %v142, %v153
    %v157 = vmul.f32 %v144, %v153
    %v158 = vmul.f32 %v146, %v153
    %v159 = vmul.f32 %v148, %v153
    %v160 = vmul.f32 %v150, %v153
    %v161 = vmul.f32 %v152, %v153
    %v162 = vmul.f32 %v129, %v129
    %v163 = vmul.f32 %v130, %v130
    %v164 = vmul.f32 %v131, %v131
    %v165 = vmul.f32 %v132, %v132
    %v166 = vmul.f32 %v133, %v133
    %v167 = vmul.f32 %v134, %v134
    %v168 = vmul.f32 %v135, %v135
    %v169 = vmul.f32 %v136, %v136
    %170 = vadd.xlane.f32.xlu0 %v162
    %v171 = vpop.xlane.xlu0 %170
    %172 = vadd.xlane.f32.xlu0 %v163
    %v173 = vpop.xlane.xlu0 %172
    %174 = vadd.xlane.f32.xlu0 %v164
    %v175 = vpop.xlane.xlu0 %174
    %176 = vadd.xlane.f32.xlu0 %v165
    %v177 = vpop.xlane.xlu0 %176
    %178 = vadd.xlane.f32.xlu0 %v166
    %v179 = vpop.xlane.xlu0 %178
    %180 = vadd.xlane.f32.xlu0 %v167
    %v181 = vpop.xlane.xlu0 %180
    %182 = vadd.xlane.f32.xlu0 %v168
    %v183 = vpop.xlane.xlu0 %182
    %184 = vadd.xlane.f32.xlu0 %v169
    %v185 = vpop.xlane.xlu0 %184
    %v186 = vmul.f32 %v171, %v153
    %v187 = vmul.f32 %v173, %v153
    %v188 = vmul.f32 %v175, %v153
    %v189 = vmul.f32 %v177, %v153
    %v190 = vmul.f32 %v179, %v153
    %v191 = vmul.f32 %v181, %v153
    %v192 = vmul.f32 %v183, %v153
    %v193 = vmul.f32 %v185, %v153
    %v194 = vmul.f32 %v154, %v154
    %v195 = vmul.f32 %v155, %v155
    %v196 = vmul.f32 %v156, %v156
    %v197 = vmul.f32 %v157, %v157
    %v198 = vmul.f32 %v158, %v158
    %v199 = vmul.f32 %v159, %v159
    %v200 = vmul.f32 %v160, %v160
    %v201 = vmul.f32 %v161, %v161
    %v202 = vsub.f32 %v186, %v194
    %v203 = vsub.f32 %v187, %v195
    %v204 = vsub.f32 %v188, %v196
    %v205 = vsub.f32 %v189, %v197
    %v206 = vsub.f32 %v190, %v198
    %v207 = vsub.f32 %v191, %v199
    %v208 = vsub.f32 %v192, %v200
    %v209 = vsub.f32 %v193, %v201
    %v210 = vmax.f32 %v202, 0.0
    %v211 = vmax.f32 %v203, 0.0
    %v212 = vmax.f32 %v204, 0.0
    %v213 = vmax.f32 %v205, 0.0
    %v214 = vmax.f32 %v206, 0.0
    %v215 = vmax.f32 %v207, 0.0
    %v216 = vmax.f32 %v208, 0.0
    %v217 = vmax.f32 %v209, 0.0
    %v218 = vadd.f32 %v210, 1e-05
    %v219 = vadd.f32 %v211, 1e-05
    %v220 = vadd.f32 %v212, 1e-05
    %v221 = vadd.f32 %v213, 1e-05
    %v222 = vadd.f32 %v214, 1e-05
    %v223 = vadd.f32 %v215, 1e-05
    %v224 = vadd.f32 %v216, 1e-05
    %v225 = vadd.f32 %v217, 1e-05
    %v226 = vrsqrt.pop %v218
    %v227 = vrsqrt.pop %v219
    %v228 = vrsqrt.pop %v220
    %v229 = vrsqrt.pop %v221
    %v230 = vrsqrt.pop %v222
    %v231 = vrsqrt.pop %v223
    %v232 = vrsqrt.pop %v224
    %v233 = vrsqrt.pop %v225
    %v234 = vmul.f32 %v25, %v226
    %v235 = vmul.f32 %v26, %v227
    %v236 = vmul.f32 %v27, %v228
    %v237 = vmul.f32 %v28, %v229
    %v238 = vmul.f32 %v29, %v230
    %v239 = vmul.f32 %v30, %v231
    %v240 = vmul.f32 %v31, %v232
    %v241 = vmul.f32 %v32, %v233
    %v242 = vmul.f32 %v154, %v234
    %v243 = vmul.f32 %v155, %v235
    %v244 = vmul.f32 %v156, %v236
    %v245 = vmul.f32 %v157, %v237
    %v246 = vmul.f32 %v158, %v238
    %v247 = vmul.f32 %v159, %v239
    %v248 = vmul.f32 %v160, %v240
    %v249 = vmul.f32 %v161, %v241
    %258 = vrot.lane.b32.xlu0 %v242, 1
    %v259 = vpop.permute.xlu0 %258
    %260 = vrot.lane.b32.xlu0 %v243, 1
    %v261 = vpop.permute.xlu0 %260
    %262 = vrot.lane.b32.xlu0 %v244, 1
    %v263 = vpop.permute.xlu0 %262
    %264 = vrot.lane.b32.xlu0 %v245, 1
    %v265 = vpop.permute.xlu0 %264
    %266 = vrot.lane.b32.xlu0 %v246, 1
    %v267 = vpop.permute.xlu0 %266
    %268 = vrot.lane.b32.xlu0 %v247, 1
    %v269 = vpop.permute.xlu0 %268
    %270 = vrot.lane.b32.xlu0 %v248, 1
    %v271 = vpop.permute.xlu0 %270
    %272 = vrot.lane.b32.xlu0 %v249, 1
    %v273 = vpop.permute.xlu0 %272
    %v282 = vsub.f32 %v25, %v259
    %v283 = vsub.f32 %v26, %v261
    %v284 = vsub.f32 %v27, %v263
    %v285 = vsub.f32 %v28, %v265
    %v286 = vsub.f32 %v29, %v267
    %v287 = vsub.f32 %v30, %v269
    %v288 = vsub.f32 %v31, %v271
    %v289 = vsub.f32 %v32, %v273
    %291 = vset.pattern.permute.xlu0 2
    %292 = vperm.xlu0 %291, %v234
    %v293 = vpop.permute.xlu0 %292
    %296 = vset.pattern.permute.xlu0 2
    %297 = vperm.xlu0 %296, %v235
    %v298 = vpop.permute.xlu0 %297
    %301 = vset.pattern.permute.xlu0 2
    %302 = vperm.xlu0 %301, %v236
    %v303 = vpop.permute.xlu0 %302
    %306 = vset.pattern.permute.xlu0 2
    %307 = vperm.xlu0 %306, %v237
    %v308 = vpop.permute.xlu0 %307
    %311 = vset.pattern.permute.xlu0 2
    %312 = vperm.xlu0 %311, %v238
    %v313 = vpop.permute.xlu0 %312
    %316 = vset.pattern.permute.xlu0 2
    %317 = vperm.xlu0 %316, %v239
    %v318 = vpop.permute.xlu0 %317
    %321 = vset.pattern.permute.xlu0 2
    %322 = vperm.xlu0 %321, %v240
    %v323 = vpop.permute.xlu0 %322
    %326 = vset.pattern.permute.xlu0 2
    %327 = vperm.xlu0 %326, %v241
    %v328 = vpop.permute.xlu0 %327
    %v330 = vmul.f32 %v129, %v293
    %v331 = vmul.f32 %v130, %v298
    %v332 = vmul.f32 %v131, %v303
    %v333 = vmul.f32 %v132, %v308
    %v334 = vmul.f32 %v133, %v313
    %v335 = vmul.f32 %v134, %v318
    %v336 = vmul.f32 %v135, %v323
    %v337 = vmul.f32 %v136, %v328
    %339 = vset.pattern.permute.xlu0 3
    %340 = vperm.xlu0 %339, %v282
    %v341 = vpop.permute.xlu0 %340
    %344 = vset.pattern.permute.xlu0 3
    %345 = vperm.xlu0 %344, %v283
    %v346 = vpop.permute.xlu0 %345
    %349 = vset.pattern.permute.xlu0 3
    %350 = vperm.xlu0 %349, %v284
    %v351 = vpop.permute.xlu0 %350
    %354 = vset.pattern.permute.xlu0 3
    %355 = vperm.xlu0 %354, %v285
    %v356 = vpop.permute.xlu0 %355
    %359 = vset.pattern.permute.xlu0 3
    %360 = vperm.xlu0 %359, %v286
    %v361 = vpop.permute.xlu0 %360
    %364 = vset.pattern.permute.xlu0 3
    %365 = vperm.xlu0 %364, %v287
    %v366 = vpop.permute.xlu0 %365
    %369 = vset.pattern.permute.xlu0 3
    %370 = vperm.xlu0 %369, %v288
    %v371 = vpop.permute.xlu0 %370
    %374 = vset.pattern.permute.xlu0 3
    %375 = vperm.xlu0 %374, %v289
    %v376 = vpop.permute.xlu0 %375
    %v378 = vadd.f32 %v330, %v341
    %v379 = vadd.f32 %v331, %v346
    %v380 = vadd.f32 %v332, %v351
    %v381 = vadd.f32 %v333, %v356
    %v382 = vadd.f32 %v334, %v361
    %v383 = vadd.f32 %v335, %v366
    %v384 = vadd.f32 %v336, %v371
    %v385 = vadd.f32 %v337, %v376
    %v386 = vmax.f32 %v378, 0.0
    %v387 = vmax.f32 %v379, 0.0
    %v388 = vmax.f32 %v380, 0.0
    %v389 = vmax.f32 %v381, 0.0
    %v390 = vmax.f32 %v382, 0.0
    %v391 = vmax.f32 %v383, 0.0
    %v392 = vmax.f32 %v384, 0.0
    %v393 = vmax.f32 %v385, 0.0
    %v394 = vld [vmem:[%s3] sm:$0xff]
    %v395 = vld [vmem:[%s3 + $0x8] sm:$0xff]
    %v396 = vld [vmem:[%s3 + $0x10] sm:$0xff]
    %v397 = vld [vmem:[%s3 + $0x18] sm:$0xff]
    %vm398 = vcmask 523264
    %v400 = vsel %vm398, %v394, 0
    %v403 = vsel %vm398, %v395, 0
    %v406 = vsel %vm398, %v396, 0
    %v409 = vsel %vm398, %v397, 0
    %411 = vmatprep.subr.mxu0 0.0
    %412 = vmatpush1.msra.mxu0 0.0
    %413 = vmatprep.subr.mxu0 0.0
    %414 = vmatpush1.msra.mxu0 0.0
    %415 = vmatprep.subr.mxu0 0.0
    %416 = vmatpush1.msra.mxu0 0.0
    %417 = vmatprep.subr.mxu0 0.0
    %418 = vmatpush1.msra.mxu0 0.0
    %419 = vmatprep.subr.mxu0 0.0
    %420 = vmatpush1.msra.mxu0 0.0
    %421 = vmatprep.subr.mxu0 0.0
    %422 = vmatpush1.msra.mxu0 0.0
    %423 = vmatprep.subr.mxu0 0.0
    %424 = vmatpush1.msra.mxu0 0.0
    %425 = vmatprep.subr.mxu0 0.0
    %426 = vmatpush1.msra.mxu0 0.0
    %427 = vmatprep.subr.mxu0 0.0
    %428 = vmatpush1.msra.mxu0 %v393
    %429 = vmatprep.subr.mxu0 0.0
    %430 = vmatpush1.msra.mxu0 %v392
    %431 = vmatprep.subr.mxu0 0.0
    %432 = vmatpush1.msra.mxu0 %v391
    %433 = vmatprep.subr.mxu0 0.0
    %434 = vmatpush1.msra.mxu0 %v390
    %435 = vmatprep.subr.mxu0 0.0
    %436 = vmatpush1.msra.mxu0 %v389
    %437 = vmatprep.subr.mxu0 0.0
    %438 = vmatpush1.msra.mxu0 %v388
    %439 = vmatprep.subr.mxu0 0.0
    %440 = vmatpush1.msra.mxu0 %v387
    %441 = vmatprep.subr.mxu0 0.0
    %442 = vmatpush1.msra.mxu0 %v386
    %443 = vmatprep.subr.mxu0 0.0
    %444 = vmatpush2.msra.mxu0 0.0
    %445 = vmatprep.subr.mxu0 0.0
    %446 = vmatpush2.msra.mxu0 0.0
    %447 = vmatprep.subr.mxu0 0.0
    %448 = vmatpush2.msra.mxu0 0.0
    %449 = vmatprep.subr.mxu0 0.0
    %450 = vmatpush2.msra.mxu0 0.0
    %451 = vmatprep.subr.mxu0 0.0
    %452 = vmatpush2.msra.mxu0 0.0
    %453 = vmatprep.subr.mxu0 0.0
    %454 = vmatpush2.msra.mxu0 0.0
    %455 = vmatprep.subr.mxu0 0.0
    %456 = vmatpush2.msra.mxu0 0.0
    %457 = vmatprep.subr.mxu0 0.0
    %458 = vmatpush2.msra.mxu0 0.0
    %459 = vmatprep.subr.mxu0 0.0
    %460 = vmatpush2.msra.mxu0 0.0
    %461 = vmatprep.subr.mxu0 0.0
    %462 = vmatpush2.msra.mxu0 0.0
    %463 = vmatprep.subr.mxu0 0.0
    %464 = vmatpush2.msra.mxu0 0.0
    %465 = vmatprep.subr.mxu0 0.0
    %466 = vmatpush2.msra.mxu0 0.0
    %467 = vmatprep.subr.mxu0 0.0
    %468 = vmatpush2.msra.mxu0 0.0
    %469 = vmatprep.subr.mxu0 0.0
    %470 = vmatpush2.msra.mxu0 0.0
    %471 = vmatprep.subr.mxu0 0.0
    %472 = vmatpush2.msra.mxu0 0.0
    %473 = vmatprep.subr.mxu0 0.0
    %474 = vmatpush2.msra.mxu0 0.0
    %475 = vmatprep.mubr.f32.mxu0 0.0
    %476 = vmatmul.mubr.f32.gmra.mxu0 %v400
    %v477 = vpop.f32.mrf.mxu0
    %v478 = vadd.f32 0.0, %v477
    %v479 = vpop.f32.mrf.mxu0
    %480 = vmatprep.mubr.f32.mxu0 0.0
    %481 = vmatmul.mubr.f32.gmra.mxu0 %v403
    %v482 = vpop.f32.mrf.mxu0
    %v483 = vadd.f32 0.0, %v482
    %v484 = vpop.f32.mrf.mxu0
    %485 = vmatprep.mubr.f32.mxu0 0.0
    %486 = vmatmul.mubr.f32.gmra.mxu0 %v406
    %v487 = vpop.f32.mrf.mxu0
    %v488 = vadd.f32 0.0, %v487
    %v489 = vpop.f32.mrf.mxu0
    %490 = vmatprep.mubr.f32.mxu0 0.0
    %491 = vmatmul.mubr.f32.gmra.mxu0 %v409
    %v492 = vpop.f32.mrf.mxu0
    %v493 = vadd.f32 0.0, %v492
    %v494 = vpop.f32.mrf.mxu0
    %495 = vdwg.mxu0
    %v496 = vlaneseq
    %v497 = vand.u32 %v496, 127
    %v498 = vstv %s20
    %vm499 = vcmp.lt.s32.totalorder %v497, %v498
    %v500 = vsel %vm499, 1, 0
    %v501 = vcvt.s32.f32 %v500
    %v502 = vmul.f32 %v478, %v501
    %v503 = vmul.f32 %v483, %v501
    %v504 = vmul.f32 %v488, %v501
    %v505 = vmul.f32 %v493, %v501
    %506 = vadd.xlane.f32.xlu0 %v502
    %v507 = vpop.xlane.xlu0 %506
    %508 = vadd.xlane.f32.xlu0 %v503
    %v509 = vpop.xlane.xlu0 %508
    %510 = vadd.xlane.f32.xlu0 %v504
    %v511 = vpop.xlane.xlu0 %510
    %512 = vadd.xlane.f32.xlu0 %v505
    %v513 = vpop.xlane.xlu0 %512
    %v514 = vmul.f32 %v507, %v153
    %v515 = vmul.f32 %v509, %v153
    %v516 = vmul.f32 %v511, %v153
    %v517 = vmul.f32 %v513, %v153
    %v518 = vmul.f32 %v502, %v478
    %v519 = vmul.f32 %v503, %v483
    %v520 = vmul.f32 %v504, %v488
    %v521 = vmul.f32 %v505, %v493
    %522 = vadd.xlane.f32.xlu0 %v518
    %v523 = vpop.xlane.xlu0 %522
    %524 = vadd.xlane.f32.xlu0 %v519
    %v525 = vpop.xlane.xlu0 %524
    %526 = vadd.xlane.f32.xlu0 %v520
    %v527 = vpop.xlane.xlu0 %526
    %528 = vadd.xlane.f32.xlu0 %v521
    %v529 = vpop.xlane.xlu0 %528
    %v530 = vmul.f32 %v523, %v153
    %v531 = vmul.f32 %v525, %v153
    %v532 = vmul.f32 %v527, %v153
    %v533 = vmul.f32 %v529, %v153
    %v534 = vmul.f32 %v514, %v514
    %v535 = vmul.f32 %v515, %v515
    %v536 = vmul.f32 %v516, %v516
    %v537 = vmul.f32 %v517, %v517
    %v538 = vsub.f32 %v530, %v534
    %v539 = vsub.f32 %v531, %v535
    %v540 = vsub.f32 %v532, %v536
    %v541 = vsub.f32 %v533, %v537
    %v542 = vmax.f32 %v538, 0.0
    %v543 = vmax.f32 %v539, 0.0
    %v544 = vmax.f32 %v540, 0.0
    %v545 = vmax.f32 %v541, 0.0
    %v546 = vadd.f32 %v542, 1e-05
    %v547 = vadd.f32 %v543, 1e-05
    %v548 = vadd.f32 %v544, 1e-05
    %v549 = vadd.f32 %v545, 1e-05
    %v550 = vrsqrt.pop %v546
    %v551 = vrsqrt.pop %v547
    %v552 = vrsqrt.pop %v548
    %v553 = vrsqrt.pop %v549
    %v554 = vmul.f32 %v25, %v550
    %v555 = vmul.f32 %v26, %v551
    %v556 = vmul.f32 %v27, %v552
    %v557 = vmul.f32 %v28, %v553
    %v558 = vmul.f32 %v514, %v554
    %v559 = vmul.f32 %v515, %v555
    %v560 = vmul.f32 %v516, %v556
    %v561 = vmul.f32 %v517, %v557
    %566 = vrot.lane.b32.xlu0 %v558, 1
    %v567 = vpop.permute.xlu0 %566
    %568 = vrot.lane.b32.xlu0 %v559, 1
    %v569 = vpop.permute.xlu0 %568
    %570 = vrot.lane.b32.xlu0 %v560, 1
    %v571 = vpop.permute.xlu0 %570
    %572 = vrot.lane.b32.xlu0 %v561, 1
    %v573 = vpop.permute.xlu0 %572
    %v578 = vsub.f32 %v25, %v567
    %v579 = vsub.f32 %v26, %v569
    %v580 = vsub.f32 %v27, %v571
    %v581 = vsub.f32 %v28, %v573
    %583 = vset.pattern.permute.xlu0 4
    %584 = vperm.xlu0 %583, %v554
    %v585 = vpop.permute.xlu0 %584
    %588 = vset.pattern.permute.xlu0 4
    %589 = vperm.xlu0 %588, %v555
    %v590 = vpop.permute.xlu0 %589
    %593 = vset.pattern.permute.xlu0 4
    %594 = vperm.xlu0 %593, %v556
    %v595 = vpop.permute.xlu0 %594
    %598 = vset.pattern.permute.xlu0 4
    %599 = vperm.xlu0 %598, %v557
    %v600 = vpop.permute.xlu0 %599
    %v602 = vmul.f32 %v478, %v585
    %v603 = vmul.f32 %v483, %v590
    %v604 = vmul.f32 %v488, %v595
    %v605 = vmul.f32 %v493, %v600
    %607 = vset.pattern.permute.xlu0 5
    %608 = vperm.xlu0 %607, %v578
    %v609 = vpop.permute.xlu0 %608
    %612 = vset.pattern.permute.xlu0 5
    %613 = vperm.xlu0 %612, %v579
    %v614 = vpop.permute.xlu0 %613
    %617 = vset.pattern.permute.xlu0 5
    %618 = vperm.xlu0 %617, %v580
    %v619 = vpop.permute.xlu0 %618
    %622 = vset.pattern.permute.xlu0 5
    %623 = vperm.xlu0 %622, %v581
    %v624 = vpop.permute.xlu0 %623
    %v626 = vadd.f32 %v602, %v609
    %v627 = vadd.f32 %v603, %v614
    %v628 = vadd.f32 %v604, %v619
    %v629 = vadd.f32 %v605, %v624
    %v630 = vmax.f32 %v626, 0.0
    %v631 = vmax.f32 %v627, 0.0
    %v632 = vmax.f32 %v628, 0.0
    %v633 = vmax.f32 %v629, 0.0
    %634 = vrot.lane.b32.xlu0 %v25, 122
    %v635 = vpop.permute.xlu0 %634
    %636 = vrot.lane.b32.xlu0 %v26, 122
    %v637 = vpop.permute.xlu0 %636
    %638 = vrot.lane.b32.xlu0 %v27, 122
    %v639 = vpop.permute.xlu0 %638
    %640 = vrot.lane.b32.xlu0 %v28, 122
    %v641 = vpop.permute.xlu0 %640
    %646 = vxpose.xlu0.b32.start [1/16] %v635, 128
    %647 = vxpose.xlu0.b32.cont [2/16] %v637, 128
    %648 = vxpose.xlu0.b32.cont [3/16] %v639, 128
    %649 = vxpose.xlu0.b32.cont [4/16] %v641, 128
    %650 = vxpose.xlu0.b32.cont [5/16] 0.0, 128
    %651 = vxpose.xlu0.b32.cont [6/16] 0.0, 128
    %652 = vxpose.xlu0.b32.cont [7/16] 0.0, 128
    %653 = vxpose.xlu0.b32.cont [8/16] 0.0, 128
    %654 = vxpose.xlu0.b32.cont [9/16] 0.0, 128
    %655 = vxpose.xlu0.b32.cont [10/16] 0.0, 128
    %656 = vxpose.xlu0.b32.cont [11/16] 0.0, 128
    %657 = vxpose.xlu0.b32.cont [12/16] 0.0, 128
    %658 = vxpose.xlu0.b32.cont [13/16] 0.0, 128
    %659 = vxpose.xlu0.b32.cont [14/16] 0.0, 128
    %660 = vxpose.xlu0.b32.cont [15/16] 0.0, 128
    %661 = vxpose.xlu0.b32.end [16/16] 0.0, 128
    %v662 = vpop.trf.xlu0
    %v663 = vpop.trf.xlu0
    %v664 = vpop.trf.xlu0
    %v665 = vpop.trf.xlu0
    %v666 = vpop.trf.xlu0
    %v667 = vpop.trf.xlu0
    %v668 = vpop.trf.xlu0
    %v669 = vpop.trf.xlu0
    %v670 = vpop.trf.xlu0
    %v671 = vpop.trf.xlu0
    %v672 = vpop.trf.xlu0
    %v673 = vpop.trf.xlu0
    %v674 = vpop.trf.xlu0
    %v675 = vpop.trf.xlu0
    %v676 = vpop.trf.xlu0
    %v677 = vpop.trf.xlu0
    %678 = vset.pattern.permute.xlu0 7
    %679 = vperm.xlu0 %678, %v25
    %v680 = vpop.permute.xlu0 %679
    %vm682 = vcmask 261120
    %v684 = vsel %vm682, %v662, 0
    %686 = vmatprep.subr.mxu0 0.0
    %687 = vmatpush1.msra.mxu0 0.0
    %688 = vmatprep.subr.mxu0 0.0
    %689 = vmatpush1.msra.mxu0 0.0
    %690 = vmatprep.subr.mxu0 0.0
    %691 = vmatpush1.msra.mxu0 0.0
    %692 = vmatprep.subr.mxu0 0.0
    %693 = vmatpush1.msra.mxu0 0.0
    %694 = vmatprep.subr.mxu0 0.0
    %695 = vmatpush1.msra.mxu0 0.0
    %696 = vmatprep.subr.mxu0 0.0
    %697 = vmatpush1.msra.mxu0 0.0
    %698 = vmatprep.subr.mxu0 0.0
    %699 = vmatpush1.msra.mxu0 0.0
    %700 = vmatprep.subr.mxu0 0.0
    %701 = vmatpush1.msra.mxu0 0.0
    %702 = vmatprep.subr.mxu0 0.0
    %703 = vmatpush1.msra.mxu0 0.0
    %704 = vmatprep.subr.mxu0 0.0
    %705 = vmatpush1.msra.mxu0 0.0
    %706 = vmatprep.subr.mxu0 0.0
    %707 = vmatpush1.msra.mxu0 0.0
    %708 = vmatprep.subr.mxu0 0.0
    %709 = vmatpush1.msra.mxu0 0.0
    %710 = vmatprep.subr.mxu0 0.0
    %711 = vmatpush1.msra.mxu0 %v633
    %712 = vmatprep.subr.mxu0 0.0
    %713 = vmatpush1.msra.mxu0 %v632
    %714 = vmatprep.subr.mxu0 0.0
    %715 = vmatpush1.msra.mxu0 %v631
    %716 = vmatprep.subr.mxu0 0.0
    %717 = vmatpush1.msra.mxu0 %v630
    %718 = vmatprep.subr.mxu0 0.0
    %719 = vmatpush2.msra.mxu0 0.0
    %720 = vmatprep.subr.mxu0 0.0
    %721 = vmatpush2.msra.mxu0 0.0
    %722 = vmatprep.subr.mxu0 0.0
    %723 = vmatpush2.msra.mxu0 0.0
    %724 = vmatprep.subr.mxu0 0.0
    %725 = vmatpush2.msra.mxu0 0.0
    %726 = vmatprep.subr.mxu0 0.0
    %727 = vmatpush2.msra.mxu0 0.0
    %728 = vmatprep.subr.mxu0 0.0
    %729 = vmatpush2.msra.mxu0 0.0
    %730 = vmatprep.subr.mxu0 0.0
    %731 = vmatpush2.msra.mxu0 0.0
    %732 = vmatprep.subr.mxu0 0.0
    %733 = vmatpush2.msra.mxu0 0.0
    %734 = vmatprep.subr.mxu0 0.0
    %735 = vmatpush2.msra.mxu0 0.0
    %736 = vmatprep.subr.mxu0 0.0
    %737 = vmatpush2.msra.mxu0 0.0
    %738 = vmatprep.subr.mxu0 0.0
    %739 = vmatpush2.msra.mxu0 0.0
    %740 = vmatprep.subr.mxu0 0.0
    %741 = vmatpush2.msra.mxu0 0.0
    %742 = vmatprep.subr.mxu0 0.0
    %743 = vmatpush2.msra.mxu0 0.0
    %744 = vmatprep.subr.mxu0 0.0
    %745 = vmatpush2.msra.mxu0 0.0
    %746 = vmatprep.subr.mxu0 0.0
    %747 = vmatpush2.msra.mxu0 0.0
    %748 = vmatprep.subr.mxu0 0.0
    %749 = vmatpush2.msra.mxu0 0.0
    %750 = vmatprep.mubr.f32.mxu0 0.0
    %751 = vmatmul.mubr.f32.gmra.mxu0 %v684
    %v752 = vpop.f32.mrf.mxu0
    %v753 = vadd.f32 %v680, %v752
    %v754 = vpop.f32.mrf.mxu0
    %755 = vdwg.mxu0
    %756 = vst [vmem:[#allocation3] sm:$0x1] %v753
    // Predicated region
    $region18: #{tpu_custom_call.1} parent=1 // pred_check
      _
    $region19: #{tpu_custom_call.1} parent=1 // pred_check_branch
      %758 = sbr.rel (0) target = $region21
    $region20: #{tpu_custom_call.1} parent=1 // pred_region
      %s760 = ssub.s32 16, 16
      %761 = vsyncadd [#allocation4], %s760
      %s763 = sshll.u32 [#allocation3], 4
      %s764 = int_to_ptr.vmem [resolvable:$true] %s763
      %766 = dma.vmem_to_hbm [thread:$0]  %s764, 16, %s4, [#allocation4]
    $region21: #{tpu_custom_call.1} parent=1 // pred_fallthru
      _
    // Predicated region
    $region22: #{tpu_custom_call.1} parent=1 // pred_check
      _
    $region23: #{tpu_custom_call.1} parent=1 // pred_check_branch
      %768 = sbr.rel (0) target = $region25
    $region24: #{tpu_custom_call.1} parent=1 // pred_region
      %769 = dma.done [#allocation4], 16
    $region25: #{tpu_custom_call.1} parent=1 // pred_fallthru
      _
    %770 = vsyncpa [#allocation4], 1

</llo_original>
